<compile_context>
chip_gen: v6e
topology: v6e:2x2x1
jax: 0.10.0
libtpu: 0.0.40
codegen_flags: <defaults>
</compile_context>

<pallas_src>
import math
import functools

import jax
import jax.numpy as jnp
from jax.experimental import pallas as pl
from jax.experimental.pallas import tpu as pltpu


def _attention_kernel(hs_ref, ctx_ref, wq_ref, bq_ref, wkv_ref, bkv_ref,
                      mask_ref, out_ref, *, num_heads, head_dim, bt):
    head_size = num_heads * head_dim
    _, sq, H = hs_ref.shape
    _, sk, Hc = ctx_ref.shape

    # Flatten the Bt batch elements into the matmul M-dim so each projection is
    # one big MXU matmul (bf16 operands, f32 accumulate). Biases stay f32.
    hs2 = hs_ref[...].reshape(bt * sq, H)          # bf16 (cast in wrapper)
    ctx2 = ctx_ref[...].reshape(bt * sk, Hc)       # bf16 (cast in wrapper)

    q = jnp.dot(hs2, wq_ref[...], preferred_element_type=jnp.float32) + bq_ref[0]
    kv = jnp.dot(ctx2, wkv_ref[...], preferred_element_type=jnp.float32) + bkv_ref[0]

    # Fold 1/sqrt(head_dim) into Q once (cheaper than scaling sq*sk scores per head).
    scale = 1.0 / math.sqrt(head_dim)
    q3 = (q * scale).reshape(bt, sq, head_size).astype(jnp.bfloat16)
    k3 = kv[:, :head_size].reshape(bt, sk, head_size).astype(jnp.bfloat16)
    v3 = kv[:, head_size:].reshape(bt, sk, head_size).astype(jnp.bfloat16)

    mask = mask_ref[...]                            # (bt, sq, sk) additive, f32

    head_outs = []
    for h in range(num_heads):                      # static unroll over heads
        lo = h * head_dim
        hi = lo + head_dim
        qh = q3[:, :, lo:hi]                        # (bt, sq, hd) bf16
        kh = k3[:, :, lo:hi]                        # (bt, sk, hd) bf16
        vh = v3[:, :, lo:hi]                        # (bt, sk, hd) bf16

        # Batched over bt; contracts last dims directly (no explicit transpose).
        scores = jnp.einsum('bqd,bkd->bqk', qh, kh,
                            preferred_element_type=jnp.float32) + mask

        # numerically-stable softmax along the key axis, f32 elementwise
        scores = scores - jnp.max(scores, axis=-1, keepdims=True)
        probs = jnp.exp(scores)
        probs = probs * pl.reciprocal(jnp.sum(probs, axis=-1, keepdims=True),
                                      approx=True)

        head_outs.append(
            jnp.einsum('bqk,bkd->bqd', probs.astype(jnp.bfloat16), vh,
                       preferred_element_type=jnp.float32))

    # One lane-dense, full-width store for the whole (bt, sq, head_size) slab.
    out = jnp.concatenate(head_outs, axis=-1)
    out_ref[...] = out.astype(out_ref.dtype)


def _pick_bt(B, Sq, target_rows=256):
    """Batch elements per grid step: enough rows to fill an MXU pass, but keep
    >=2 grid steps when B allows (so both v7x TensorCores get work)."""
    want = max(1, min(B, -(-target_rows // Sq)))
    if B >= 2 and want >= B:
        want = max(1, B // 2)
    for cand in range(want, 0, -1):
        if B % cand == 0:
            return cand
    return 1


def lxmert_attention(hidden_states, context, attention_mask,
                     wq, bq, wk, bk, wv, bv, *, num_heads):
    """hidden_states: (B, Sq, H), context: (B, Sk, Hctx).
    attention_mask: additive, shape (B, Sq, Sk) or HF-style (B, 1, 1, Sk); None ok.
    Weights are (H_in, H_out) (== PyTorch weight.T); biases (H_out,).
    Returns (B, Sq, head_size) float32 (eval mode: attention dropout is identity)."""
    B, Sq, H = hidden_states.shape
    _, Sk, Hctx = context.shape
    head_size = wq.shape[1]
    assert head_size % num_heads == 0
    head_dim = head_size // num_heads

    if attention_mask is None:
        attention_mask = jnp.zeros((B, Sq, Sk), jnp.float32)
    if attention_mask.ndim == 4:               # HF-style (B, 1, 1, Sk) etc.
        attention_mask = jnp.broadcast_to(attention_mask[:, 0], (B, Sq, Sk))
    attention_mask = attention_mask.astype(jnp.float32)

    bt = _pick_bt(B, Sq)
    grid = (B // bt,)

    # bf16 activations + weights (MXU-native operands, half the DMA bytes);
    # biases stay f32 for the accumulator add.
    hs_b = hidden_states.astype(jnp.bfloat16)
    ctx_b = context.astype(jnp.bfloat16)
    wq_b = wq.astype(jnp.bfloat16)
    wkv_b = jnp.concatenate([wk, wv], axis=1).astype(jnp.bfloat16)     # (Hctx, 2*hs)
    bq2 = bq.reshape(1, -1).astype(jnp.float32)
    bkv2 = jnp.concatenate([bk, bv]).reshape(1, -1).astype(jnp.float32)

    kernel = functools.partial(_attention_kernel, num_heads=num_heads,
                               head_dim=head_dim, bt=bt)

    flops = (2 * B * Sq * H * head_size                       # Q projection
             + 2 * 2 * B * Sk * Hctx * head_size              # fused K/V projection
             + 2 * 2 * B * num_heads * Sq * Sk * head_dim)    # QK^T and P@V
    bytes_accessed = (hs_b.size * 2 + ctx_b.size * 2
                      + attention_mask.size * 4
                      + (wq_b.size + wkv_b.size) * 2
                      + (bq2.size + bkv2.size) * 4
                      + B * Sq * head_size * 4)
    cost = pl.CostEstimate(flops=flops,
                           transcendentals=B * num_heads * Sq * Sk,
                           bytes_accessed=bytes_accessed)

    return pl.pallas_call(
        kernel,
        out_shape=jax.ShapeDtypeStruct((B, Sq, head_size), jnp.float32),
        grid_spec=pltpu.PrefetchScalarGridSpec(
            num_scalar_prefetch=0,
            grid=grid,
            in_specs=[
                pl.BlockSpec((bt, Sq, H),          lambda b: (b, 0, 0)),  # hidden_states (bf16)
                pl.BlockSpec((bt, Sk, Hctx),       lambda b: (b, 0, 0)),  # context (bf16)
                pl.BlockSpec((H,    head_size),    lambda b: (0, 0)),     # Wq (bf16)
                pl.BlockSpec((1,    head_size),    lambda b: (0, 0)),     # bq
                pl.BlockSpec((Hctx, 2 * head_size), lambda b: (0, 0)),    # [Wk|Wv] (bf16)
                pl.BlockSpec((1,    2 * head_size), lambda b: (0, 0)),    # [bk|bv]
                pl.BlockSpec((bt, Sq, Sk),         lambda b: (b, 0, 0)),  # additive mask
            ],
            out_specs=pl.BlockSpec((bt, Sq, head_size), lambda b: (b, 0, 0)),
        ),
        compiler_params=pltpu.CompilerParams(
            dimension_semantics=("parallel",)),
        cost_estimate=cost,
    )(hs_b, ctx_b, wq_b, bq2, wkv_b, bkv2, attention_mask)


def _reference(hidden_states, context, attention_mask, wq, bq, wk, bk, wv, bv,
               *, num_heads):
    # plain-JAX f32 reference mirroring the PyTorch forward
    B, Sq, H = hidden_states.shape
    _, Sk, _ = context.shape
    head_size = wq.shape[1]
    hd = head_size // num_heads

    def split(x):  # (B, S, head_size) -> (B, nh, S, hd)
        B_, S_, _ = x.shape
        return x.reshape(B_, S_, num_heads, hd).transpose(0, 2, 1, 3)

    q = split(hidden_states @ wq + bq)
    k = split(context @ wk + bk)
    v = split(context @ wv + bv)
    scores = jnp.einsum("bhqd,bhkd->bhqk", q, k) / math.sqrt(hd)
    scores = scores + attention_mask[:, None, :, :]
    probs = jax.nn.softmax(scores, axis=-1)
    ctx_layer = jnp.einsum("bhqk,bhkd->bhqd", probs, v)
    return ctx_layer.transpose(0, 2, 1, 3).reshape(B, Sq, head_size)


if __name__ == "__main__":
    # config: hidden_size=32, num_attention_heads=4, ctx_dim=32
    B, Sq, Sk, H = 2, 8, 8, 32
    NUM_HEADS = 4

    key = jax.random.PRNGKey(0)
    k_hs, k_ctx, k_wq, k_wk, k_wv, k_bq, k_bk, k_bv, k_mask = jax.random.split(key, 9)

    hidden_states = jax.random.normal(k_hs, (B, Sq, H), dtype=jnp.float32)
    context = jax.random.normal(k_ctx, (B, Sk, H), dtype=jnp.float32)

    # deterministic linear params (W stored as [in, out] == PyTorch W.T)
    wq = jax.random.normal(k_wq, (H, H), dtype=jnp.float32) * 0.05
    wk = jax.random.normal(k_wk, (H, H), dtype=jnp.float32) * 0.05
    wv = jax.random.normal(k_wv, (H, H), dtype=jnp.float32) * 0.05
    bq = jax.random.normal(k_bq, (H,), dtype=jnp.float32) * 0.05
    bk = jax.random.normal(k_bk, (H,), dtype=jnp.float32) * 0.05
    bv = jax.random.normal(k_bv, (H,), dtype=jnp.float32) * 0.05

    # additive attention mask (HF-style: 0 for keep, -10000 for masked)
    keep = (jax.random.uniform(k_mask, (B, Sq, Sk)) > 0.2).astype(jnp.float32)
    attention_mask = (1.0 - keep) * -10000.0

    out = lxmert_attention(hidden_states, context, attention_mask,
                           wq, bq, wk, bk, wv, bv, num_heads=NUM_HEADS)
    out = jax.block_until_ready(out)

    ref = _reference(hidden_states, context, attention_mask,
                     wq, bq, wk, bk, wv, bv, num_heads=NUM_HEADS)
    assert out.shape == (B, Sq, H)
    # bf16 matmul operands + approx reciprocal => slightly looser tolerance vs f32 ref
    assert jnp.allclose(out, ref, atol=2e-2, rtol=1e-2), "mismatch vs reference"

    print("KERNEL_OK")
</pallas_src>

<mosaic_0001>
module attributes {stable_mosaic.version = 11 : i64} {
  func.func @_attention_kernel(%arg0: i32, %arg1: memref<1x8x32xbf16, #tpu.memory_space<vmem>>, %arg2: memref<1x8x32xbf16, #tpu.memory_space<vmem>>, %arg3: memref<32x32xbf16, #tpu.memory_space<vmem>>, %arg4: memref<1x32xf32, #tpu.memory_space<vmem>>, %arg5: memref<32x64xbf16, #tpu.memory_space<vmem>>, %arg6: memref<1x64xf32, #tpu.memory_space<vmem>>, %arg7: memref<1x8x8xf32, #tpu.memory_space<vmem>>, %arg8: memref<1x8x32xf32, #tpu.memory_space<vmem>>) attributes {dimension_semantics = [#tpu.dimension_semantics<parallel>], iteration_bounds = array<i64: 2>, scalar_prefetch = 0 : i64, scratch_operands = 0 : i64, tpu.core_type = #tpu.core_type<tc>, window_params = [{transform_indices = @transform_0, window_bounds = array<i64: 1, 8, 32>}, {transform_indices = @transform_1, window_bounds = array<i64: 1, 8, 32>}, {pipeline_mode = #tpu.pipeline_mode<synchronous>, transform_indices = @transform_2, window_bounds = array<i64: 32, 32>}, {pipeline_mode = #tpu.pipeline_mode<synchronous>, transform_indices = @transform_3, window_bounds = array<i64: 1, 32>}, {pipeline_mode = #tpu.pipeline_mode<synchronous>, transform_indices = @transform_4, window_bounds = array<i64: 32, 64>}, {pipeline_mode = #tpu.pipeline_mode<synchronous>, transform_indices = @transform_5, window_bounds = array<i64: 1, 64>}, {transform_indices = @transform_6, window_bounds = array<i64: 1, 8, 8>}, {transform_indices = @transform_7, window_bounds = array<i64: 1, 8, 32>}]} {
    %c0 = arith.constant 0 : index
    %c0_0 = arith.constant 0 : index
    %c0_1 = arith.constant 0 : index
    %0 = vector.load %arg1[%c0, %c0_0, %c0_1] : memref<1x8x32xbf16, #tpu.memory_space<vmem>>, vector<1x8x32xbf16>
    %1 = vector.shape_cast %0 : vector<1x8x32xbf16> to vector<8x32xbf16>
    %c0_2 = arith.constant 0 : index
    %c0_3 = arith.constant 0 : index
    %c0_4 = arith.constant 0 : index
    %2 = vector.load %arg2[%c0_2, %c0_3, %c0_4] : memref<1x8x32xbf16, #tpu.memory_space<vmem>>, vector<1x8x32xbf16>
    %3 = vector.shape_cast %2 : vector<1x8x32xbf16> to vector<8x32xbf16>
    %c0_5 = arith.constant 0 : index
    %c0_6 = arith.constant 0 : index
    %4 = vector.load %arg3[%c0_5, %c0_6] : memref<32x32xbf16, #tpu.memory_space<vmem>>, vector<32x32xbf16>
    %cst = arith.constant dense<0.000000e+00> : vector<8x32xf32>
    %5 = tpu.matmul %1, %4, %cst {dimension_numbers = #tpu.dot_dimension_numbers<[1], [0], [0], [1], [0, 0, 1, 1], [], []>} : vector<8x32xbf16>, vector<32x32xbf16>, vector<8x32xf32> -> vector<8x32xf32>
    %c0_7 = arith.constant 0 : index
    %c0_8 = arith.constant 0 : index
    %6 = vector.load %arg4[%c0_7, %c0_8] : memref<1x32xf32, #tpu.memory_space<vmem>>, vector<1x32xf32>
    %7 = vector.shape_cast %6 : vector<1x32xf32> to vector<32xf32>
    %8 = vector.shape_cast %7 : vector<32xf32> to vector<1x32xf32>
    %9 = vector.broadcast %8 : vector<1x32xf32> to vector<8x32xf32>
    %10 = arith.addf %5, %9 : vector<8x32xf32>
    %c0_9 = arith.constant 0 : index
    %c0_10 = arith.constant 0 : index
    %11 = vector.load %arg5[%c0_9, %c0_10] : memref<32x64xbf16, #tpu.memory_space<vmem>>, vector<32x64xbf16>
    %cst_11 = arith.constant dense<0.000000e+00> : vector<8x64xf32>
    %12 = tpu.matmul %3, %11, %cst_11 {dimension_numbers = #tpu.dot_dimension_numbers<[1], [0], [0], [1], [0, 0, 1, 1], [], []>} : vector<8x32xbf16>, vector<32x64xbf16>, vector<8x64xf32> -> vector<8x64xf32>
    %c0_12 = arith.constant 0 : index
    %c0_13 = arith.constant 0 : index
    %13 = vector.load %arg6[%c0_12, %c0_13] : memref<1x64xf32, #tpu.memory_space<vmem>>, vector<1x64xf32>
    %14 = vector.shape_cast %13 : vector<1x64xf32> to vector<64xf32>
    %15 = vector.shape_cast %14 : vector<64xf32> to vector<1x64xf32>
    %16 = vector.broadcast %15 : vector<1x64xf32> to vector<8x64xf32>
    %17 = arith.addf %12, %16 : vector<8x64xf32>
    %cst_14 = arith.constant 0.353553385 : f32
    %18 = vector.broadcast %cst_14 : f32 to vector<8x32xf32>
    %19 = arith.mulf %10, %18 : vector<8x32xf32>
    %20 = vector.shape_cast %19 : vector<8x32xf32> to vector<1x8x32xf32>
    %21 = arith.truncf %20 : vector<1x8x32xf32> to vector<1x8x32xbf16>
    %22 = vector.extract_strided_slice %17 {offsets = [0, 0], sizes = [8, 32], strides = [1, 1]} : vector<8x64xf32> to vector<8x32xf32>
    %23 = vector.shape_cast %22 : vector<8x32xf32> to vector<1x8x32xf32>
    %24 = arith.truncf %23 : vector<1x8x32xf32> to vector<1x8x32xbf16>
    %25 = vector.extract_strided_slice %17 {offsets = [0, 32], sizes = [8, 32], strides = [1, 1]} : vector<8x64xf32> to vector<8x32xf32>
    %26 = vector.shape_cast %25 : vector<8x32xf32> to vector<1x8x32xf32>
    %27 = arith.truncf %26 : vector<1x8x32xf32> to vector<1x8x32xbf16>
    %c0_15 = arith.constant 0 : index
    %c0_16 = arith.constant 0 : index
    %c0_17 = arith.constant 0 : index
    %28 = vector.load %arg7[%c0_15, %c0_16, %c0_17] : memref<1x8x8xf32, #tpu.memory_space<vmem>>, vector<1x8x8xf32>
    %29 = vector.extract_strided_slice %21 {offsets = [0, 0, 0], sizes = [1, 8, 8], strides = [1, 1, 1]} : vector<1x8x32xbf16> to vector<1x8x8xbf16>
    %30 = vector.extract_strided_slice %24 {offsets = [0, 0, 0], sizes = [1, 8, 8], strides = [1, 1, 1]} : vector<1x8x32xbf16> to vector<1x8x8xbf16>
    %31 = vector.extract_strided_slice %27 {offsets = [0, 0, 0], sizes = [1, 8, 8], strides = [1, 1, 1]} : vector<1x8x32xbf16> to vector<1x8x8xbf16>
    "tpu.trace_start"() <{level = 10 : i32, message = "bqd,bkd->bqk"}> : () -> ()
    %cst_18 = arith.constant dense<0.000000e+00> : vector<1x8x8xf32>
    %32 = tpu.matmul %29, %30, %cst_18 {dimension_numbers = #tpu.dot_dimension_numbers<[2], [2], [1], [1], [0, 0, 0, 1, 1, 1], [0], [0]>} : vector<1x8x8xbf16>, vector<1x8x8xbf16>, vector<1x8x8xf32> -> vector<1x8x8xf32>
    "tpu.trace_stop"() : () -> ()
    %33 = arith.addf %32, %28 : vector<1x8x8xf32>
    %cst_19 = arith.constant dense<0xFF800000> : vector<1x8xf32>
    %34 = vector.multi_reduction <maximumf>, %33, %cst_19 [2] : vector<1x8x8xf32> to vector<1x8xf32>
    %35 = vector.shape_cast %34 : vector<1x8xf32> to vector<1x8x1xf32>
    %36 = vector.broadcast %35 : vector<1x8x1xf32> to vector<1x8x8xf32>
    %37 = arith.subf %33, %36 : vector<1x8x8xf32>
    %38 = math.exp %37 : vector<1x8x8xf32>
    %cst_20 = arith.constant dense<0.000000e+00> : vector<1x8xf32>
    %39 = vector.multi_reduction <add>, %38, %cst_20 [2] : vector<1x8x8xf32> to vector<1x8xf32>
    %40 = vector.shape_cast %39 : vector<1x8xf32> to vector<1x8x1xf32>
    %41 = tpu.reciprocal %40 {approx = true} : vector<1x8x1xf32> -> vector<1x8x1xf32>
    %42 = vector.broadcast %41 : vector<1x8x1xf32> to vector<1x8x8xf32>
    %43 = arith.mulf %38, %42 : vector<1x8x8xf32>
    %44 = arith.truncf %43 : vector<1x8x8xf32> to vector<1x8x8xbf16>
    "tpu.trace_start"() <{level = 10 : i32, message = "bqk,bkd->bqd"}> : () -> ()
    %cst_21 = arith.constant dense<0.000000e+00> : vector<1x8x8xf32>
    %45 = tpu.matmul %44, %31, %cst_21 {dimension_numbers = #tpu.dot_dimension_numbers<[2], [1], [1], [2], [0, 0, 0, 1, 1, 2], [0], [0]>} : vector<1x8x8xbf16>, vector<1x8x8xbf16>, vector<1x8x8xf32> -> vector<1x8x8xf32>
    "tpu.trace_stop"() : () -> ()
    %46 = vector.extract_strided_slice %21 {offsets = [0, 0, 8], sizes = [1, 8, 8], strides = [1, 1, 1]} : vector<1x8x32xbf16> to vector<1x8x8xbf16>
    %47 = vector.extract_strided_slice %24 {offsets = [0, 0, 8], sizes = [1, 8, 8], strides = [1, 1, 1]} : vector<1x8x32xbf16> to vector<1x8x8xbf16>
    %48 = vector.extract_strided_slice %27 {offsets = [0, 0, 8], sizes = [1, 8, 8], strides = [1, 1, 1]} : vector<1x8x32xbf16> to vector<1x8x8xbf16>
    "tpu.trace_start"() <{level = 10 : i32, message = "bqd,bkd->bqk"}> : () -> ()
    %cst_22 = arith.constant dense<0.000000e+00> : vector<1x8x8xf32>
    %49 = tpu.matmul %46, %47, %cst_22 {dimension_numbers = #tpu.dot_dimension_numbers<[2], [2], [1], [1], [0, 0, 0, 1, 1, 1], [0], [0]>} : vector<1x8x8xbf16>, vector<1x8x8xbf16>, vector<1x8x8xf32> -> vector<1x8x8xf32>
    "tpu.trace_stop"() : () -> ()
    %50 = arith.addf %49, %28 : vector<1x8x8xf32>
    %cst_23 = arith.constant dense<0xFF800000> : vector<1x8xf32>
    %51 = vector.multi_reduction <maximumf>, %50, %cst_23 [2] : vector<1x8x8xf32> to vector<1x8xf32>
    %52 = vector.shape_cast %51 : vector<1x8xf32> to vector<1x8x1xf32>
    %53 = vector.broadcast %52 : vector<1x8x1xf32> to vector<1x8x8xf32>
    %54 = arith.subf %50, %53 : vector<1x8x8xf32>
    %55 = math.exp %54 : vector<1x8x8xf32>
    %cst_24 = arith.constant dense<0.000000e+00> : vector<1x8xf32>
    %56 = vector.multi_reduction <add>, %55, %cst_24 [2] : vector<1x8x8xf32> to vector<1x8xf32>
    %57 = vector.shape_cast %56 : vector<1x8xf32> to vector<1x8x1xf32>
    %58 = tpu.reciprocal %57 {approx = true} : vector<1x8x1xf32> -> vector<1x8x1xf32>
    %59 = vector.broadcast %58 : vector<1x8x1xf32> to vector<1x8x8xf32>
    %60 = arith.mulf %55, %59 : vector<1x8x8xf32>
    %61 = arith.truncf %60 : vector<1x8x8xf32> to vector<1x8x8xbf16>
    "tpu.trace_start"() <{level = 10 : i32, message = "bqk,bkd->bqd"}> : () -> ()
    %cst_25 = arith.constant dense<0.000000e+00> : vector<1x8x8xf32>
    %62 = tpu.matmul %61, %48, %cst_25 {dimension_numbers = #tpu.dot_dimension_numbers<[2], [1], [1], [2], [0, 0, 0, 1, 1, 2], [0], [0]>} : vector<1x8x8xbf16>, vector<1x8x8xbf16>, vector<1x8x8xf32> -> vector<1x8x8xf32>
    "tpu.trace_stop"() : () -> ()
    %63 = vector.extract_strided_slice %21 {offsets = [0, 0, 16], sizes = [1, 8, 8], strides = [1, 1, 1]} : vector<1x8x32xbf16> to vector<1x8x8xbf16>
    %64 = vector.extract_strided_slice %24 {offsets = [0, 0, 16], sizes = [1, 8, 8], strides = [1, 1, 1]} : vector<1x8x32xbf16> to vector<1x8x8xbf16>
    %65 = vector.extract_strided_slice %27 {offsets = [0, 0, 16], sizes = [1, 8, 8], strides = [1, 1, 1]} : vector<1x8x32xbf16> to vector<1x8x8xbf16>
    "tpu.trace_start"() <{level = 10 : i32, message = "bqd,bkd->bqk"}> : () -> ()
    %cst_26 = arith.constant dense<0.000000e+00> : vector<1x8x8xf32>
    %66 = tpu.matmul %63, %64, %cst_26 {dimension_numbers = #tpu.dot_dimension_numbers<[2], [2], [1], [1], [0, 0, 0, 1, 1, 1], [0], [0]>} : vector<1x8x8xbf16>, vector<1x8x8xbf16>, vector<1x8x8xf32> -> vector<1x8x8xf32>
    "tpu.trace_stop"() : () -> ()
    %67 = arith.addf %66, %28 : vector<1x8x8xf32>
    %cst_27 = arith.constant dense<0xFF800000> : vector<1x8xf32>
    %68 = vector.multi_reduction <maximumf>, %67, %cst_27 [2] : vector<1x8x8xf32> to vector<1x8xf32>
    %69 = vector.shape_cast %68 : vector<1x8xf32> to vector<1x8x1xf32>
    %70 = vector.broadcast %69 : vector<1x8x1xf32> to vector<1x8x8xf32>
    %71 = arith.subf %67, %70 : vector<1x8x8xf32>
    %72 = math.exp %71 : vector<1x8x8xf32>
    %cst_28 = arith.constant dense<0.000000e+00> : vector<1x8xf32>
    %73 = vector.multi_reduction <add>, %72, %cst_28 [2] : vector<1x8x8xf32> to vector<1x8xf32>
    %74 = vector.shape_cast %73 : vector<1x8xf32> to vector<1x8x1xf32>
    %75 = tpu.reciprocal %74 {approx = true} : vector<1x8x1xf32> -> vector<1x8x1xf32>
    %76 = vector.broadcast %75 : vector<1x8x1xf32> to vector<1x8x8xf32>
    %77 = arith.mulf %72, %76 : vector<1x8x8xf32>
    %78 = arith.truncf %77 : vector<1x8x8xf32> to vector<1x8x8xbf16>
    "tpu.trace_start"() <{level = 10 : i32, message = "bqk,bkd->bqd"}> : () -> ()
    %cst_29 = arith.constant dense<0.000000e+00> : vector<1x8x8xf32>
    %79 = tpu.matmul %78, %65, %cst_29 {dimension_numbers = #tpu.dot_dimension_numbers<[2], [1], [1], [2], [0, 0, 0, 1, 1, 2], [0], [0]>} : vector<1x8x8xbf16>, vector<1x8x8xbf16>, vector<1x8x8xf32> -> vector<1x8x8xf32>
    "tpu.trace_stop"() : () -> ()
    %80 = vector.extract_strided_slice %21 {offsets = [0, 0, 24], sizes = [1, 8, 8], strides = [1, 1, 1]} : vector<1x8x32xbf16> to vector<1x8x8xbf16>
    %81 = vector.extract_strided_slice %24 {offsets = [0, 0, 24], sizes = [1, 8, 8], strides = [1, 1, 1]} : vector<1x8x32xbf16> to vector<1x8x8xbf16>
    %82 = vector.extract_strided_slice %27 {offsets = [0, 0, 24], sizes = [1, 8, 8], strides = [1, 1, 1]} : vector<1x8x32xbf16> to vector<1x8x8xbf16>
    "tpu.trace_start"() <{level = 10 : i32, message = "bqd,bkd->bqk"}> : () -> ()
    %cst_30 = arith.constant dense<0.000000e+00> : vector<1x8x8xf32>
    %83 = tpu.matmul %80, %81, %cst_30 {dimension_numbers = #tpu.dot_dimension_numbers<[2], [2], [1], [1], [0, 0, 0, 1, 1, 1], [0], [0]>} : vector<1x8x8xbf16>, vector<1x8x8xbf16>, vector<1x8x8xf32> -> vector<1x8x8xf32>
    "tpu.trace_stop"() : () -> ()
    %84 = arith.addf %83, %28 : vector<1x8x8xf32>
    %cst_31 = arith.constant dense<0xFF800000> : vector<1x8xf32>
    %85 = vector.multi_reduction <maximumf>, %84, %cst_31 [2] : vector<1x8x8xf32> to vector<1x8xf32>
    %86 = vector.shape_cast %85 : vector<1x8xf32> to vector<1x8x1xf32>
    %87 = vector.broadcast %86 : vector<1x8x1xf32> to vector<1x8x8xf32>
    %88 = arith.subf %84, %87 : vector<1x8x8xf32>
    %89 = math.exp %88 : vector<1x8x8xf32>
    %cst_32 = arith.constant dense<0.000000e+00> : vector<1x8xf32>
    %90 = vector.multi_reduction <add>, %89, %cst_32 [2] : vector<1x8x8xf32> to vector<1x8xf32>
    %91 = vector.shape_cast %90 : vector<1x8xf32> to vector<1x8x1xf32>
    %92 = tpu.reciprocal %91 {approx = true} : vector<1x8x1xf32> -> vector<1x8x1xf32>
    %93 = vector.broadcast %92 : vector<1x8x1xf32> to vector<1x8x8xf32>
    %94 = arith.mulf %89, %93 : vector<1x8x8xf32>
    %95 = arith.truncf %94 : vector<1x8x8xf32> to vector<1x8x8xbf16>
    "tpu.trace_start"() <{level = 10 : i32, message = "bqk,bkd->bqd"}> : () -> ()
    %cst_33 = arith.constant dense<0.000000e+00> : vector<1x8x8xf32>
    %96 = tpu.matmul %95, %82, %cst_33 {dimension_numbers = #tpu.dot_dimension_numbers<[2], [1], [1], [2], [0, 0, 0, 1, 1, 2], [0], [0]>} : vector<1x8x8xbf16>, vector<1x8x8xbf16>, vector<1x8x8xf32> -> vector<1x8x8xf32>
    "tpu.trace_stop"() : () -> ()
    %97 = tpu.concatenate %45, %62, %79, %96 in 2 : vector<1x8x8xf32>, vector<1x8x8xf32>, vector<1x8x8xf32>, vector<1x8x8xf32> -> vector<1x8x32xf32>
    %c0_34 = arith.constant 0 : index
    %c0_35 = arith.constant 0 : index
    %c0_36 = arith.constant 0 : index
    %98 = vector.load %arg8[%c0_34, %c0_35, %c0_36] : memref<1x8x32xf32, #tpu.memory_space<vmem>>, vector<1x8x32xf32>
    tpu.vector_store %arg8[%c0_34, %c0_35, %c0_36], %97 {strides = array<i32>} : memref<1x8x32xf32, #tpu.memory_space<vmem>>, vector<1x8x32xf32>,
    return
  }
  func.func @transform_0(%arg0: i32) -> (i32, i32, i32) {
    %c0_i32 = arith.constant 0 : i32
    %c0_i32_0 = arith.constant 0 : i32
    %c0_i32_1 = arith.constant 0 : i32
    return %arg0, %c0_i32, %c0_i32_0 : i32, i32, i32
  }
  func.func @transform_1(%arg0: i32) -> (i32, i32, i32) {
    %c0_i32 = arith.constant 0 : i32
    %c0_i32_0 = arith.constant 0 : i32
    %c0_i32_1 = arith.constant 0 : i32
    return %arg0, %c0_i32, %c0_i32_0 : i32, i32, i32
  }
  func.func @transform_2(%arg0: i32) -> (i32, i32) {
    %c0_i32 = arith.constant 0 : i32
    %c0_i32_0 = arith.constant 0 : i32
    %c0_i32_1 = arith.constant 0 : i32
    return %c0_i32, %c0_i32_0 : i32, i32
  }
  func.func @transform_3(%arg0: i32) -> (i32, i32) {
    %c0_i32 = arith.constant 0 : i32
    %c0_i32_0 = arith.constant 0 : i32
    %c0_i32_1 = arith.constant 0 : i32
    return %c0_i32, %c0_i32_0 : i32, i32
  }
  func.func @transform_4(%arg0: i32) -> (i32, i32) {
    %c0_i32 = arith.constant 0 : i32
    %c0_i32_0 = arith.constant 0 : i32
    %c0_i32_1 = arith.constant 0 : i32
    return %c0_i32, %c0_i32_0 : i32, i32
  }
  func.func @transform_5(%arg0: i32) -> (i32, i32) {
    %c0_i32 = arith.constant 0 : i32
    %c0_i32_0 = arith.constant 0 : i32
    %c0_i32_1 = arith.constant 0 : i32
    return %c0_i32, %c0_i32_0 : i32, i32
  }
  func.func @transform_6(%arg0: i32) -> (i32, i32, i32) {
    %c0_i32 = arith.constant 0 : i32
    %c0_i32_0 = arith.constant 0 : i32
    %c0_i32_1 = arith.constant 0 : i32
    return %arg0, %c0_i32, %c0_i32_0 : i32, i32, i32
  }
  func.func @transform_7(%arg0: i32) -> (i32, i32, i32) {
    %c0_i32 = arith.constant 0 : i32
    %c0_i32_0 = arith.constant 0 : i32
    %c0_i32_1 = arith.constant 0 : i32
    return %arg0, %c0_i32, %c0_i32_0 : i32, i32, i32
  }
}

</mosaic_0001>

<llo_original>
// kernel: tpu_custom_call.1
$region0: #{tpu_custom_call.1}
  #allocation0 [shape = 'u32[]', space=smem, size = 0x4, offset = 0x4, fixed_abs, tag = 'smem constant byte address 0x4 - core index']
  #allocation1 [shape = 'u32[144,128]{1,0:T(1,128)}', space=vmem, size = 0x12000, scoped, tag = 'internal scratch']
  %s0 = inlined_call_operand.hbm [shape: bf16[2,8,32], index: 0, kind: input, shape index: {}]
  %s1 = inlined_call_operand.hbm [shape: bf16[2,8,32], index: 1, kind: input, shape index: {}]
  %s2 = inlined_call_operand.hbm [shape: bf16[32,32], index: 2, kind: input, shape index: {}]
  %s3 = inlined_call_operand.vmem [shape: f32[1,32], index: 3, kind: input, shape index: {}]
  %s4 = inlined_call_operand.hbm [shape: bf16[32,64], index: 4, kind: input, shape index: {}]
  %s5 = inlined_call_operand.vmem [shape: f32[1,64], index: 5, kind: input, shape index: {}]
  %s6 = inlined_call_operand.hbm [shape: f32[2,8,8], index: 6, kind: input, shape index: {}]
  %s7 = inlined_call_operand.hbm [shape: f32[2,8,32], index: 7, kind: output, shape index: {}]
  %s8 = sld [smem:[#allocation0]]
  $region81: #{tpu_custom_call.1} parent=0
    _
  %s10 = ssub.s32 1, %s8
  %s11 = scalar_select 0, %s10, %s8
  $region1: #{tpu_custom_call.1} parent=0
    #allocation2 [shape = 'u8[4096]{0}', space=vmem, size = 0x1000, scoped, tag = 'input window, operand 0']
    #allocation3 [shape = 's32[2]{0}', space=sflag, size = 0x8, scoped, tag = 'scoped memory for tpu_custom_call.1']
    #allocation4 [shape = 's32[2]{0}', space=sflag, size = 0x8, scoped, tag = 'scoped memory for tpu_custom_call.1']
    #allocation5 [shape = 'u8[4096]{0}', space=vmem, size = 0x1000, scoped, tag = 'input window, operand 1']
    #allocation6 [shape = 's32[2]{0}', space=sflag, size = 0x8, scoped, tag = 'scoped memory for tpu_custom_call.1']
    #allocation7 [shape = 'u8[8192]{0}', space=vmem, size = 0x2000, scoped, tag = 'input window, operand 2, single buffered']
    #allocation8 [shape = 'u8[8192]{0}', space=vmem, size = 0x2000, scoped, tag = 'input window, operand 4, single buffered']
    #allocation9 [shape = 's32[1]{0}', space=sflag, size = 0x4, scoped, tag = 'scoped memory for tpu_custom_call.1']
    #allocation10 [shape = 'u8[8192]{0}', space=vmem, size = 0x2000, scoped, tag = 'input window, operand 6']
    #allocation11 [shape = 'u8[8192]{0}', space=vmem, size = 0x2000, scoped, tag = 'output window, operand 0']
    %12 = vsyncpa [#allocation3], 0
    %s13 = scalar_lea.sflag [#allocation3], 1
    %14 = vsyncpa %s13, 0
    %15 = vsyncpa [#allocation6], 0
    %s16 = scalar_lea.sflag [#allocation6], 1
    %17 = vsyncpa %s16, 0
    %18 = vsyncpa [#allocation9], 0
    %19 = vsyncpa [#allocation4], 0
    %s20 = scalar_lea.sflag [#allocation4], 1
    %21 = vsyncpa %s20, 0
    loop: start=0, step=1, limit=4
    $region2: #{tpu_custom_call.1} parent=1 // loop_pre_header
      _
    $region3: #{tpu_custom_call.1} parent=1 // loop_header
      %s23 = sphi 0, %s27
      %p24 = scmp.ge.s32.totalorder %s23, 4
      %s33 = sphi 0, %s35
      %s36 = sphi 0, %s33
      %s37 = sphi 0, %s36
      %s53 = sphi 0, %s37
      %s59 = sphi 0, %s61
      %s62 = sphi 0, %s59
      %s63 = sphi 0, %s62
      %s79 = sphi 0, %s63
      %s83 = sphi 0, %s83
      %s85 = sphi 0, %s83
      %s86 = sphi 0, %s85
      %s100 = sphi 0, %s86
      %s104 = sphi 0, %s104
      %s106 = sphi 0, %s104
      %s107 = sphi 0, %s106
      %s121 = sphi 0, %s107
      %s125 = sphi 0, %s125
      %s127 = sphi 0, %s125
      %s128 = sphi 0, %s127
      %s142 = sphi 0, %s128
      %s146 = sphi 0, %s146
      %s148 = sphi 0, %s146
      %s149 = sphi 0, %s148
      %s163 = sphi 0, %s149
      %s169 = sphi 0, %s171
      %s172 = sphi 0, %s169
      %s173 = sphi 0, %s172
      %s189 = sphi 0, %s173
      %s195 = sphi 0, %s197
      %s198 = sphi 0, %s195
      %s199 = sphi 0, %s198
      %s215 = sphi 0, %s199
    $region4: #{tpu_custom_call.1} parent=1 // loop_header_branch
      %26 = sbr.rel (%p24) target = $region8
    $region5: #{tpu_custom_call.1} parent=1 // loop_body
      %s28 = ssub.s32 %s23, 1
      %s29 = ssub.s32 %s23, 2
      %s30 = sadd.s32 %s23, 1
      %s31 = ssub.s32 %s23, %s30
      %p32 = scmp.eq.s32.totalorder %s31, 0
      %s34 = sadd.s32 %s33, 1
      %s35 = scalar_select %p32, %s33, %s34
      %p38 = pneg %p32
      %p39 = scmp.eq.s32.totalorder %s23, 1
      %p40 = por %p38, %p39
      %p41 = scmp.ne.s32.totalorder %s33, %s36
      %p42 = scmp.eq.s32.totalorder %s23, 0
      %p43 = por %p41, %p42
      %p44 = scmp.ne.s32.totalorder %s33, %s36
      %p45 = scmp.eq.s32.totalorder %s28, 1
      %p46 = por %p44, %p45
      %p47 = scmp.ne.s32.totalorder %s36, %s37
      %p48 = scmp.eq.s32.totalorder %s28, 0
      %p49 = por %p47, %p48
      %p50 = scmp.ne.s32.totalorder %s36, %s37
      %p51 = scmp.eq.s32.totalorder %s29, 1
      %p52 = por %p50, %p51
      %p54 = scmp.ne.s32.totalorder %s37, %s53
      %p55 = scmp.eq.s32.totalorder %s29, 0
      %p56 = por %p54, %p55
      %s57 = ssub.s32 %s23, %s30
      %p58 = scmp.eq.s32.totalorder %s57, 0
      %s60 = sadd.s32 %s59, 1
      %s61 = scalar_select %p58, %s59, %s60
      %p64 = pneg %p58
      %p65 = scmp.eq.s32.totalorder %s23, 1
      %p66 = por %p64, %p65
      %p67 = scmp.ne.s32.totalorder %s59, %s62
      %p68 = scmp.eq.s32.totalorder %s23, 0
      %p69 = por %p67, %p68
      %p70 = scmp.ne.s32.totalorder %s59, %s62
      %p71 = scmp.eq.s32.totalorder %s28, 1
      %p72 = por %p70, %p71
      %p73 = scmp.ne.s32.totalorder %s62, %s63
      %p74 = scmp.eq.s32.totalorder %s28, 0
      %p75 = por %p73, %p74
      %p76 = scmp.ne.s32.totalorder %s62, %s63
      %p77 = scmp.eq.s32.totalorder %s29, 1
      %p78 = por %p76, %p77
      %p80 = scmp.ne.s32.totalorder %s63, %s79
      %p81 = scmp.eq.s32.totalorder %s29, 0
      %p82 = por %p80, %p81
      %s84 = sadd.s32 %s83, 1
      %p87 = scmp.eq.s32.totalorder %s23, 1
      %p88 = scmp.ne.s32.totalorder %s83, %s85
      %p89 = scmp.eq.s32.totalorder %s23, 0
      %p90 = por %p88, %p89
      %p91 = scmp.ne.s32.totalorder %s83, %s85
      %p92 = scmp.eq.s32.totalorder %s28, 1
      %p93 = por %p91, %p92
      %p94 = scmp.ne.s32.totalorder %s85, %s86
      %p95 = scmp.eq.s32.totalorder %s28, 0
      %p96 = por %p94, %p95
      %p97 = scmp.ne.s32.totalorder %s85, %s86
      %p98 = scmp.eq.s32.totalorder %s29, 1
      %p99 = por %p97, %p98
      %p101 = scmp.ne.s32.totalorder %s86, %s100
      %p102 = scmp.eq.s32.totalorder %s29, 0
      %p103 = por %p101, %p102
      %s105 = sadd.s32 %s104, 1
      %p108 = scmp.eq.s32.totalorder %s23, 1
      %p109 = scmp.ne.s32.totalorder %s104, %s106
      %p110 = scmp.eq.s32.totalorder %s23, 0
      %p111 = por %p109, %p110
      %p112 = scmp.ne.s32.totalorder %s104, %s106
      %p113 = scmp.eq.s32.totalorder %s28, 1
      %p114 = por %p112, %p113
      %p115 = scmp.ne.s32.totalorder %s106, %s107
      %p116 = scmp.eq.s32.totalorder %s28, 0
      %p117 = por %p115, %p116
      %p118 = scmp.ne.s32.totalorder %s106, %s107
      %p119 = scmp.eq.s32.totalorder %s29, 1
      %p120 = por %p118, %p119
      %p122 = scmp.ne.s32.totalorder %s107, %s121
      %p123 = scmp.eq.s32.totalorder %s29, 0
      %p124 = por %p122, %p123
      %s126 = sadd.s32 %s125, 1
      %p129 = scmp.eq.s32.totalorder %s23, 1
      %p130 = scmp.ne.s32.totalorder %s125, %s127
      %p131 = scmp.eq.s32.totalorder %s23, 0
      %p132 = por %p130, %p131
      %p133 = scmp.ne.s32.totalorder %s125, %s127
      %p134 = scmp.eq.s32.totalorder %s28, 1
      %p135 = por %p133, %p134
      %p136 = scmp.ne.s32.totalorder %s127, %s128
      %p137 = scmp.eq.s32.totalorder %s28, 0
      %p138 = por %p136, %p137
      %p139 = scmp.ne.s32.totalorder %s127, %s128
      %p140 = scmp.eq.s32.totalorder %s29, 1
      %p141 = por %p139, %p140
      %p143 = scmp.ne.s32.totalorder %s128, %s142
      %p144 = scmp.eq.s32.totalorder %s29, 0
      %p145 = por %p143, %p144
      %s147 = sadd.s32 %s146, 1
      %p150 = scmp.eq.s32.totalorder %s23, 1
      %p151 = scmp.ne.s32.totalorder %s146, %s148
      %p152 = scmp.eq.s32.totalorder %s23, 0
      %p153 = por %p151, %p152
      %p154 = scmp.ne.s32.totalorder %s146, %s148
      %p155 = scmp.eq.s32.totalorder %s28, 1
      %p156 = por %p154, %p155
      %p157 = scmp.ne.s32.totalorder %s148, %s149
      %p158 = scmp.eq.s32.totalorder %s28, 0
      %p159 = por %p157, %p158
      %p160 = scmp.ne.s32.totalorder %s148, %s149
      %p161 = scmp.eq.s32.totalorder %s29, 1
      %p162 = por %p160, %p161
      %p164 = scmp.ne.s32.totalorder %s149, %s163
      %p165 = scmp.eq.s32.totalorder %s29, 0
      %p166 = por %p164, %p165
      %s167 = ssub.s32 %s23, %s30
      %p168 = scmp.eq.s32.totalorder %s167, 0
      %s170 = sadd.s32 %s169, 1
      %s171 = scalar_select %p168, %s169, %s170
      %p174 = pneg %p168
      %p175 = scmp.eq.s32.totalorder %s23, 1
      %p176 = por %p174, %p175
      %p177 = scmp.ne.s32.totalorder %s169, %s172
      %p178 = scmp.eq.s32.totalorder %s23, 0
      %p179 = por %p177, %p178
      %p180 = scmp.ne.s32.totalorder %s169, %s172
      %p181 = scmp.eq.s32.totalorder %s28, 1
      %p182 = por %p180, %p181
      %p183 = scmp.ne.s32.totalorder %s172, %s173
      %p184 = scmp.eq.s32.totalorder %s28, 0
      %p185 = por %p183, %p184
      %p186 = scmp.ne.s32.totalorder %s172, %s173
      %p187 = scmp.eq.s32.totalorder %s29, 1
      %p188 = por %p186, %p187
      %p190 = scmp.ne.s32.totalorder %s173, %s189
      %p191 = scmp.eq.s32.totalorder %s29, 0
      %p192 = por %p190, %p191
      %s193 = ssub.s32 %s23, %s30
      %p194 = scmp.eq.s32.totalorder %s193, 0
      %s196 = sadd.s32 %s195, 1
      %s197 = scalar_select %p194, %s195, %s196
      %p200 = pneg %p194
      %p201 = scmp.eq.s32.totalorder %s23, 1
      %p202 = por %p200, %p201
      %p203 = scmp.ne.s32.totalorder %s195, %s198
      %p204 = scmp.eq.s32.totalorder %s23, 0
      %p205 = por %p203, %p204
      %p206 = scmp.ne.s32.totalorder %s195, %s198
      %p207 = scmp.eq.s32.totalorder %s28, 1
      %p208 = por %p206, %p207
      %p209 = scmp.ne.s32.totalorder %s198, %s199
      %p210 = scmp.eq.s32.totalorder %s28, 0
      %p211 = por %p209, %p210
      %p212 = scmp.ne.s32.totalorder %s198, %s199
      %p213 = scmp.eq.s32.totalorder %s29, 1
      %p214 = por %p212, %p213
      %p216 = scmp.ne.s32.totalorder %s199, %s215
      %p217 = scmp.eq.s32.totalorder %s29, 0
      %p218 = por %p216, %p217
      %p219 = scmp.le.s32.totalorder 1, %s23
      %p220 = scmp.lt.s32.totalorder %s23, 3
      %p221 = pnand %p219, %p220
      %p222 = pneg %p221
      // Predicated region
      $region9: #{tpu_custom_call.1} parent=5 // pred_check
        _
      $region10: #{tpu_custom_call.1} parent=5 // pred_check_branch
        %224 = sbr.rel (%p221) target = $region12
      $region11: #{tpu_custom_call.1} parent=5 // pred_region
        %s225 = ssub.s32 %s23, 1
        // Predicated region
        $region13: #{tpu_custom_call.1} parent=11 // pred_check
          %p226 = pneg %p96
        $region14: #{tpu_custom_call.1} parent=11 // pred_check_branch
          %228 = sbr.rel (%p226) target = $region16
        $region15: #{tpu_custom_call.1} parent=11 // pred_region
          %s230 = ssub.s32 256, 256
          %231 = vsyncadd [#allocation6], %s230
          %s232 = sshll.u32 [#allocation7], 4
          %s233 = int_to_ptr.vmem [resolvable:$true] %s232
          %238 = dma.hbm_to_vmem [thread:$0]  %s2, 256, %s233, [#allocation6], 64, 64, 4
        $region16: #{tpu_custom_call.1} parent=11 // pred_fallthru
          _
        // Predicated region
        $region17: #{tpu_custom_call.1} parent=11 // pred_check
          %p239 = pneg %p117
        $region18: #{tpu_custom_call.1} parent=11 // pred_check_branch
          %241 = sbr.rel (%p239) target = $region20
        $region19: #{tpu_custom_call.1} parent=11 // pred_region
          _
        $region20: #{tpu_custom_call.1} parent=11 // pred_fallthru
          _
        // Predicated region
        $region21: #{tpu_custom_call.1} parent=11 // pred_check
          %p242 = pneg %p138
        $region22: #{tpu_custom_call.1} parent=11 // pred_check_branch
          %244 = sbr.rel (%p242) target = $region24
        $region23: #{tpu_custom_call.1} parent=11 // pred_region
          %s246 = ssub.s32 256, 256
          %247 = vsyncadd [#allocation9], %s246
          %s248 = sshll.u32 [#allocation8], 4
          %s249 = int_to_ptr.vmem [resolvable:$true] %s248
          %254 = dma.hbm_to_vmem [thread:$0]  %s4, 256, %s249, [#allocation9], 64, 64, 4
        $region24: #{tpu_custom_call.1} parent=11 // pred_fallthru
          _
        // Predicated region
        $region25: #{tpu_custom_call.1} parent=11 // pred_check
          %p255 = pneg %p159
        $region26: #{tpu_custom_call.1} parent=11 // pred_check_branch
          %257 = sbr.rel (%p255) target = $region28
        $region27: #{tpu_custom_call.1} parent=11 // pred_region
          _
        $region28: #{tpu_custom_call.1} parent=11 // pred_fallthru
          _
      $region12: #{tpu_custom_call.1} parent=5 // pred_fallthru
        _
      %p258 = scmp.lt.s32.totalorder %s23, 2
      // Predicated region
      $region29: #{tpu_custom_call.1} parent=5 // pred_check
        %p259 = pneg %p258
      $region30: #{tpu_custom_call.1} parent=5 // pred_check_branch
        %261 = sbr.rel (%p259) target = $region32
      $region31: #{tpu_custom_call.1} parent=5 // pred_region
        // Predicated region
        $region33: #{tpu_custom_call.1} parent=31 // pred_check
          %p262 = pneg %p43
        $region34: #{tpu_custom_call.1} parent=31 // pred_check_branch
          %264 = sbr.rel (%p262) target = $region36
        $region35: #{tpu_custom_call.1} parent=31 // pred_region
          %s265 = sand.u32 %s23, 1
          %s266 = scalar_lea.sflag [#allocation3], %s265
          %s267 = sand.u32 %s33, 1
          %s268 = smul.addr %s267, 4
          %s269 = scalar_lea.vmem [#allocation2], %s268
          %s271 = ssub.s32 64, 64
          %272 = vsyncadd %s266, %s271
          %s273 = smul.addr %s23, 64
          %s274 = scalar_lea.hbm %s0, %s273
          %s276 = sshll.u32 %s269, 4
          %s277 = int_to_ptr.vmem [resolvable:$true] %s276
          %279 = dma.hbm_to_vmem [thread:$0]  %s274, 64, %s277, %s266
        $region36: #{tpu_custom_call.1} parent=31 // pred_fallthru
          _
        // Predicated region
        $region37: #{tpu_custom_call.1} parent=31 // pred_check
          %p280 = pneg %p69
        $region38: #{tpu_custom_call.1} parent=31 // pred_check_branch
          %282 = sbr.rel (%p280) target = $region40
        $region39: #{tpu_custom_call.1} parent=31 // pred_region
          %s283 = sand.u32 %s23, 1
          %s284 = scalar_lea.sflag [#allocation6], %s283
          %s285 = sand.u32 %s59, 1
          %s286 = smul.addr %s285, 4
          %s287 = scalar_lea.vmem [#allocation5], %s286
          %s289 = ssub.s32 64, 64
          %290 = vsyncadd %s284, %s289
          %s291 = smul.addr %s23, 64
          %s292 = scalar_lea.hbm %s1, %s291
          %s294 = sshll.u32 %s287, 4
          %s295 = int_to_ptr.vmem [resolvable:$true] %s294
          %297 = dma.hbm_to_vmem [thread:$0]  %s292, 64, %s295, %s284
        $region40: #{tpu_custom_call.1} parent=31 // pred_fallthru
          _
        // Predicated region
        $region41: #{tpu_custom_call.1} parent=31 // pred_check
          %p298 = pneg %p179
        $region42: #{tpu_custom_call.1} parent=31 // pred_check_branch
          %300 = sbr.rel (%p298) target = $region44
        $region43: #{tpu_custom_call.1} parent=31 // pred_region
          %s301 = sand.u32 %s23, 1
          %s302 = scalar_lea.sflag [#allocation3], %s301
          %s303 = sand.u32 %s169, 1
          %s304 = smul.addr %s303, 8
          %s305 = scalar_lea.vmem [#allocation10], %s304
          %s307 = ssub.s32 128, 128
          %308 = vsyncadd %s302, %s307
          %s309 = smul.addr %s23, 128
          %s310 = scalar_lea.hbm %s6, %s309
          %s312 = sshll.u32 %s305, 4
          %s313 = int_to_ptr.vmem [resolvable:$true] %s312
          %315 = dma.hbm_to_vmem [thread:$0]  %s310, 128, %s313, %s302
        $region44: #{tpu_custom_call.1} parent=31 // pred_fallthru
          _
      $region32: #{tpu_custom_call.1} parent=5 // pred_fallthru
        _
      %p316 = scmp.le.s32.totalorder 1, %s23
      %p317 = scmp.lt.s32.totalorder %s23, 3
      %p318 = pnand %p316, %p317
      %p319 = pneg %p318
      // Predicated region
      $region45: #{tpu_custom_call.1} parent=5 // pred_check
        _
      $region46: #{tpu_custom_call.1} parent=5 // pred_check_branch
        %321 = sbr.rel (%p318) target = $region48
      $region47: #{tpu_custom_call.1} parent=5 // pred_region
        %s322 = ssub.s32 %s23, 1
        %s323 = sand.u32 %s28, 1
        %s324 = scalar_lea.sflag [#allocation3], %s323
        %s325 = sand.u32 %s36, 1
        %s326 = smul.addr %s325, 4
        %s327 = scalar_lea.vmem [#allocation2], %s326
        // Predicated region
        $region49: #{tpu_custom_call.1} parent=47 // pred_check
          %p328 = pneg %p49
        $region50: #{tpu_custom_call.1} parent=47 // pred_check_branch
          %330 = sbr.rel (%p328) target = $region52
        $region51: #{tpu_custom_call.1} parent=47 // pred_region
          %331 = dma.done %s324, 64
        $region52: #{tpu_custom_call.1} parent=47 // pred_fallthru
          _
        %s332 = sand.u32 %s28, 1
        %s333 = scalar_lea.sflag [#allocation6], %s332
        %s334 = sand.u32 %s62, 1
        %s335 = smul.addr %s334, 4
        %s336 = scalar_lea.vmem [#allocation5], %s335
        // Predicated region
        $region53: #{tpu_custom_call.1} parent=47 // pred_check
          %p337 = pneg %p75
        $region54: #{tpu_custom_call.1} parent=47 // pred_check_branch
          %339 = sbr.rel (%p337) target = $region56
        $region55: #{tpu_custom_call.1} parent=47 // pred_region
          %340 = dma.done %s333, 64
        $region56: #{tpu_custom_call.1} parent=47 // pred_fallthru
          _
        // Predicated region
        $region57: #{tpu_custom_call.1} parent=47 // pred_check
          %p341 = pneg %p96
        $region58: #{tpu_custom_call.1} parent=47 // pred_check_branch
          %343 = sbr.rel (%p341) target = $region60
        $region59: #{tpu_custom_call.1} parent=47 // pred_region
          %344 = dma.done [#allocation6], 256
        $region60: #{tpu_custom_call.1} parent=47 // pred_fallthru
          _
        // Predicated region
        $region61: #{tpu_custom_call.1} parent=47 // pred_check
          %p345 = pneg %p138
        $region62: #{tpu_custom_call.1} parent=47 // pred_check_branch
          %347 = sbr.rel (%p345) target = $region64
        $region63: #{tpu_custom_call.1} parent=47 // pred_region
          %348 = dma.done [#allocation9], 256
        $region64: #{tpu_custom_call.1} parent=47 // pred_fallthru
          _
        %s349 = sand.u32 %s28, 1
        %s350 = scalar_lea.sflag [#allocation3], %s349
        %s351 = sand.u32 %s172, 1
        %s352 = smul.addr %s351, 8
        %s353 = scalar_lea.vmem [#allocation10], %s352
        // Predicated region
        $region65: #{tpu_custom_call.1} parent=47 // pred_check
          %p354 = pneg %p185
        $region66: #{tpu_custom_call.1} parent=47 // pred_check_branch
          %356 = sbr.rel (%p354) target = $region68
        $region67: #{tpu_custom_call.1} parent=47 // pred_region
          %357 = dma.done %s350, 128
        $region68: #{tpu_custom_call.1} parent=47 // pred_fallthru
          _
        %s358 = sand.u32 %s28, 1
        %s359 = scalar_lea.sflag [#allocation3], %s358
        %s360 = sand.u32 %s36, 1
        %s361 = smul.addr %s360, 4
        %s362 = scalar_lea.vmem [#allocation2], %s361
        %p363 = pneg %p49
        %p364 = pneg %p46
        %s365 = sand.u32 %s28, 1
        %s366 = scalar_lea.sflag [#allocation6], %s365
        %s367 = sand.u32 %s62, 1
        %s368 = smul.addr %s367, 4
        %s369 = scalar_lea.vmem [#allocation5], %s368
        %p370 = pneg %p75
        %p371 = pneg %p72
        %p372 = pneg %p96
        %p373 = pneg %p93
        %p374 = pneg %p117
        %p375 = pneg %p114
        %p376 = pneg %p138
        %p377 = pneg %p135
        %p378 = pneg %p159
        %p379 = pneg %p156
        %s380 = sand.u32 %s28, 1
        %s381 = scalar_lea.sflag [#allocation3], %s380
        %s382 = sand.u32 %s172, 1
        %s383 = smul.addr %s382, 8
        %s384 = scalar_lea.vmem [#allocation10], %s383
        %p385 = pneg %p185
        %p386 = pneg %p182
        %p387 = pneg %p211
        %p388 = pneg %p208
        %s389 = sand.u32 %s198, 1
        %s390 = scalar_lea.sflag [#allocation4], %s389
        %s391 = sand.u32 %s198, 1
        %s392 = smul.addr %s391, 8
        %s393 = scalar_lea.vmem [#allocation11], %s392
        %v395 = vld [vmem:[%s327] sm:$0xf]
        %v396 = vld [vmem:[%s336] sm:$0xf]
        %v397 = vld [vmem:[#allocation7] sm:$0xf]
        %v398 = vld [vmem:[#allocation7 + $0x4] sm:$0xf]
        %v399 = vld [vmem:[#allocation7 + $0x8] sm:$0xf]
        %v400 = vld [vmem:[#allocation7 + $0xc] sm:$0xf]
        %v401 = vld [vmem:[%s3] sm:$0x1]
        %v403 = vlaneseq
        %v404 = vshrl.u32 %v403, 7
        %v405 = vsub.s32 0, %v404
        %v406 = vrot.slane %v401, %v405
        %v412 = vunpack.c.l.b16 %v397
        %v413 = vunpack.c.l.b16 %v398
        %v414 = vunpack.c.l.b16 %v399
        %v415 = vunpack.c.l.b16 %v400
        %v416 = vpack.c.b16 %v413, %v412
        %v417 = vpack.c.b16 %v415, %v414
        %vm420 = vcmask 261120
        %v422 = vsel %vm420, %v395, 0
        %424 = vmatprep.subr.bf16.mxu0 0
        %425 = vmatpush1.bf16.msra.mxu0 0
        %426 = vmatprep.subr.bf16.mxu0 0
        %427 = vmatpush1.bf16.msra.mxu0 0
        %428 = vmatprep.subr.bf16.mxu0 0
        %429 = vmatpush1.bf16.msra.mxu0 0
        %430 = vmatprep.subr.bf16.mxu0 0
        %431 = vmatpush1.bf16.msra.mxu0 0
        %432 = vmatprep.subr.bf16.mxu0 0
        %433 = vmatpush1.bf16.msra.mxu0 0
        %434 = vmatprep.subr.bf16.mxu0 0
        %435 = vmatpush1.bf16.msra.mxu0 0
        %436 = vmatprep.subr.bf16.mxu0 0
        %437 = vmatpush1.bf16.msra.mxu0 %v417
        %438 = vmatprep.subr.bf16.mxu0 0
        %439 = vmatpush1.bf16.msra.mxu0 %v416
        %440 = vmatprep.subr.bf16.mxu0 0
        %441 = vmatpush2.bf16.msra.mxu0 0
        %442 = vmatprep.subr.bf16.mxu0 0
        %443 = vmatpush2.bf16.msra.mxu0 0
        %444 = vmatprep.subr.bf16.mxu0 0
        %445 = vmatpush2.bf16.msra.mxu0 0
        %446 = vmatprep.subr.bf16.mxu0 0
        %447 = vmatpush2.bf16.msra.mxu0 0
        %448 = vmatprep.subr.bf16.mxu0 0
        %449 = vmatpush2.bf16.msra.mxu0 0
        %450 = vmatprep.subr.bf16.mxu0 0
        %451 = vmatpush2.bf16.msra.mxu0 0
        %452 = vmatprep.subr.bf16.mxu0 0
        %453 = vmatpush2.bf16.msra.mxu0 0
        %454 = vmatprep.subr.bf16.mxu0 0
        %455 = vmatpush2.bf16.msra.mxu0 0
        %456 = vmatprep.mubr.bf16.mxu0 0
        %457 = vmatmul.mubr.bf16.gmra.mxu0 %v422
        %v458 = vpop.f32.mrf.mxu0
        %v459 = vadd.f32 %v406, %v458
        %v460 = vpop.f32.mrf.mxu0
        %v461 = vpop.f32.mrf.mxu0
        %v462 = vpop.f32.mrf.mxu0
        %463 = vdwg.mxu0
        %v464 = vld [vmem:[#allocation8] sm:$0xf]
        %v465 = vld [vmem:[#allocation8 + $0x4] sm:$0xf]
        %v466 = vld [vmem:[#allocation8 + $0x8] sm:$0xf]
        %v467 = vld [vmem:[#allocation8 + $0xc] sm:$0xf]
        %v468 = vld [vmem:[%s5] sm:$0x1]
        %v470 = vlaneseq
        %v471 = vshrl.u32 %v470, 7
        %v472 = vsub.s32 0, %v471
        %v473 = vrot.slane %v468, %v472
        %v479 = vunpack.c.l.b16 %v464
        %v480 = vunpack.c.l.b16 %v465
        %v481 = vunpack.c.l.b16 %v466
        %v482 = vunpack.c.l.b16 %v467
        %v483 = vpack.c.b16 %v480, %v479
        %v484 = vpack.c.b16 %v482, %v481
        %v488 = vsel %vm420, %v396, 0
        %490 = vmatprep.subr.bf16.mxu0 0
        %491 = vmatpush1.bf16.msra.mxu0 0
        %492 = vmatprep.subr.bf16.mxu0 0
        %493 = vmatpush1.bf16.msra.mxu0 0
        %494 = vmatprep.subr.bf16.mxu0 0
        %495 = vmatpush1.bf16.msra.mxu0 0
        %496 = vmatprep.subr.bf16.mxu0 0
        %497 = vmatpush1.bf16.msra.mxu0 0
        %498 = vmatprep.subr.bf16.mxu0 0
        %499 = vmatpush1.bf16.msra.mxu0 0
        %500 = vmatprep.subr.bf16.mxu0 0
        %501 = vmatpush1.bf16.msra.mxu0 0
        %502 = vmatprep.subr.bf16.mxu0 0
        %503 = vmatpush1.bf16.msra.mxu0 %v484
        %504 = vmatprep.subr.bf16.mxu0 0
        %505 = vmatpush1.bf16.msra.mxu0 %v483
        %506 = vmatprep.subr.bf16.mxu0 0
        %507 = vmatpush2.bf16.msra.mxu0 0
        %508 = vmatprep.subr.bf16.mxu0 0
        %509 = vmatpush2.bf16.msra.mxu0 0
        %510 = vmatprep.subr.bf16.mxu0 0
        %511 = vmatpush2.bf16.msra.mxu0 0
        %512 = vmatprep.subr.bf16.mxu0 0
        %513 = vmatpush2.bf16.msra.mxu0 0
        %514 = vmatprep.subr.bf16.mxu0 0
        %515 = vmatpush2.bf16.msra.mxu0 0
        %516 = vmatprep.subr.bf16.mxu0 0
        %517 = vmatpush2.bf16.msra.mxu0 0
        %518 = vmatprep.subr.bf16.mxu0 0
        %519 = vmatpush2.bf16.msra.mxu0 0
        %520 = vmatprep.subr.bf16.mxu0 0
        %521 = vmatpush2.bf16.msra.mxu0 0
        %522 = vmatprep.mubr.bf16.mxu0 0
        %523 = vmatmul.mubr.bf16.gmra.mxu0 %v488
        %v524 = vpop.f32.mrf.mxu0
        %v525 = vadd.f32 %v473, %v524
        %v526 = vpop.f32.mrf.mxu0
        %v527 = vpop.f32.mrf.mxu0
        %v528 = vpop.f32.mrf.mxu0
        %529 = vdwg.mxu0
        %v530 = vmul.f32 %v459, 0.35355338
        %v531 = vpack.c.bf16 %v530, %v530
        %v532 = vpack.c.bf16 %v525, %v525
        %v533 = vld [vmem:[%s353] sm:$0xff]
        %vm534 = vcmask 64512
        %v536 = vsel %vm534, %v531, 0
        %v539 = vsel %vm534, %v532, 0
        %541 = vmatprep.subr.bf16.mxu0 0
        %542 = vmatpush1.bf16.xpose.msra.mxu0 0
        %543 = vmatprep.subr.bf16.mxu0 0
        %544 = vmatpush1.bf16.xpose.msra.mxu0 0
        %545 = vmatprep.subr.bf16.mxu0 0
        %546 = vmatpush1.bf16.xpose.msra.mxu0 0
        %547 = vmatprep.subr.bf16.mxu0 0
        %548 = vmatpush1.bf16.xpose.msra.mxu0 0
        %549 = vmatprep.subr.bf16.mxu0 0
        %550 = vmatpush1.bf16.xpose.msra.mxu0 0
        %551 = vmatprep.subr.bf16.mxu0 0
        %552 = vmatpush1.bf16.xpose.msra.mxu0 0
        %553 = vmatprep.subr.bf16.mxu0 0
        %554 = vmatpush1.bf16.xpose.msra.mxu0 0
        %555 = vmatprep.subr.bf16.mxu0 0
        %556 = vmatpush1.bf16.xpose.msra.mxu0 %v539
        %557 = vmatprep.subr.bf16.mxu0 0
        %558 = vmatpush2.bf16.xpose.msra.mxu0 0
        %559 = vmatprep.subr.bf16.mxu0 0
        %560 = vmatpush2.bf16.xpose.msra.mxu0 0
        %561 = vmatprep.subr.bf16.mxu0 0
        %562 = vmatpush2.bf16.xpose.msra.mxu0 0
        %563 = vmatprep.subr.bf16.mxu0 0
        %564 = vmatpush2.bf16.xpose.msra.mxu0 0
        %565 = vmatprep.subr.bf16.mxu0 0
        %566 = vmatpush2.bf16.xpose.msra.mxu0 0
        %567 = vmatprep.subr.bf16.mxu0 0
        %568 = vmatpush2.bf16.xpose.msra.mxu0 0
        %569 = vmatprep.subr.bf16.mxu0 0
        %570 = vmatpush2.bf16.xpose.msra.mxu0 0
        %571 = vmatprep.subr.bf16.mxu0 0
        %572 = vmatpush2.bf16.xpose.msra.mxu0 0
        %573 = vmatprep.mubr.bf16.mxu0 0
        %574 = vmatmul.mubr.bf16.gmra.mxu0 %v536
        %v575 = vpop.f32.mrf.mxu0
        %v576 = vadd.f32 %v533, %v575
        %v577 = vpop.f32.mrf.mxu0
        %v578 = vpop.f32.mrf.mxu0
        %v579 = vpop.f32.mrf.mxu0
        %580 = vdwg.mxu0
        %v581 = vsel %vm534, %v576, -inf
        %582 = vmax.xlane.f32.xlu0 %v581
        %v583 = vpop.xlane.xlu0 %582
        %v584 = vsub.f32 %v576, %v583
        %v585 = vmul.f32 %v584, 1.442695
        %v586 = vpow.pop %v585
        %v587 = vsel %vm534, %v586, 0.0
        %588 = vadd.xlane.f32.xlu0 %v587
        %v589 = vpop.xlane.xlu0 %588
        %v590 = vrcp.pop %v589
        %v591 = vmul.f32 %v586, %v590
        %v592 = vpack.c.bf16 %v591, %v591
        %594 = vrot.lane.b32.xlu0 %v532, 96
        %v595 = vpop.permute.xlu0 %594
        %v597 = vsel %vm534, %v592, 0
        %vm599 = vcmask 1043456
        %v601 = vsel %vm599, %v595, 0
        %603 = vmatprep.subr.bf16.mxu0 0
        %604 = vmatpush1.bf16.msra.mxu0 0
        %605 = vmatprep.subr.bf16.mxu0 0
        %606 = vmatpush1.bf16.msra.mxu0 0
        %607 = vmatprep.subr.bf16.mxu0 0
        %608 = vmatpush1.bf16.msra.mxu0 0
        %609 = vmatprep.subr.bf16.mxu0 0
        %610 = vmatpush1.bf16.msra.mxu0 0
        %611 = vmatprep.subr.bf16.mxu0 0
        %612 = vmatpush1.bf16.msra.mxu0 0
        %613 = vmatprep.subr.bf16.mxu0 0
        %614 = vmatpush1.bf16.msra.mxu0 0
        %615 = vmatprep.subr.bf16.mxu0 0
        %616 = vmatpush1.bf16.msra.mxu0 0
        %617 = vmatprep.subr.bf16.mxu0 0
        %618 = vmatpush1.bf16.msra.mxu0 %v601
        %619 = vmatprep.subr.bf16.mxu0 0
        %620 = vmatpush2.bf16.msra.mxu0 0
        %621 = vmatprep.subr.bf16.mxu0 0
        %622 = vmatpush2.bf16.msra.mxu0 0
        %623 = vmatprep.subr.bf16.mxu0 0
        %624 = vmatpush2.bf16.msra.mxu0 0
        %625 = vmatprep.subr.bf16.mxu0 0
        %626 = vmatpush2.bf16.msra.mxu0 0
        %627 = vmatprep.subr.bf16.mxu0 0
        %628 = vmatpush2.bf16.msra.mxu0 0
        %629 = vmatprep.subr.bf16.mxu0 0
        %630 = vmatpush2.bf16.msra.mxu0 0
        %631 = vmatprep.subr.bf16.mxu0 0
        %632 = vmatpush2.bf16.msra.mxu0 0
        %633 = vmatprep.subr.bf16.mxu0 0
        %634 = vmatpush2.bf16.msra.mxu0 0
        %635 = vmatprep.mubr.bf16.mxu0 0
        %636 = vmatmul.mubr.bf16.gmra.mxu0 %v597
        %v637 = vpop.f32.mrf.mxu0
        %v638 = vadd.f32 0.0, %v637
        %v639 = vpop.f32.mrf.mxu0
        %v640 = vpop.f32.mrf.mxu0
        %v641 = vpop.f32.mrf.mxu0
        %642 = vdwg.mxu0
        %644 = vrot.lane.b32.xlu0 %v531, 120
        %v645 = vpop.permute.xlu0 %644
        %646 = vrot.lane.b32.xlu0 %v532, 120
        %v647 = vpop.permute.xlu0 %646
        %v649 = vsel %vm534, %v645, 0
        %v652 = vsel %vm534, %v647, 0
        %654 = vmatprep.subr.bf16.mxu0 0
        %655 = vmatpush1.bf16.xpose.msra.mxu0 0
        %656 = vmatprep.subr.bf16.mxu0 0
        %657 = vmatpush1.bf16.xpose.msra.mxu0 0
        %658 = vmatprep.subr.bf16.mxu0 0
        %659 = vmatpush1.bf16.xpose.msra.mxu0 0
        %660 = vmatprep.subr.bf16.mxu0 0
        %661 = vmatpush1.bf16.xpose.msra.mxu0 0
        %662 = vmatprep.subr.bf16.mxu0 0
        %663 = vmatpush1.bf16.xpose.msra.mxu0 0
        %664 = vmatprep.subr.bf16.mxu0 0
        %665 = vmatpush1.bf16.xpose.msra.mxu0 0
        %666 = vmatprep.subr.bf16.mxu0 0
        %667 = vmatpush1.bf16.xpose.msra.mxu0 0
        %668 = vmatprep.subr.bf16.mxu0 0
        %669 = vmatpush1.bf16.xpose.msra.mxu0 %v652
        %670 = vmatprep.subr.bf16.mxu0 0
        %671 = vmatpush2.bf16.xpose.msra.mxu0 0
        %672 = vmatprep.subr.bf16.mxu0 0
        %673 = vmatpush2.bf16.xpose.msra.mxu0 0
        %674 = vmatprep.subr.bf16.mxu0 0
        %675 = vmatpush2.bf16.xpose.msra.mxu0 0
        %676 = vmatprep.subr.bf16.mxu0 0
        %677 = vmatpush2.bf16.xpose.msra.mxu0 0
        %678 = vmatprep.subr.bf16.mxu0 0
        %679 = vmatpush2.bf16.xpose.msra.mxu0 0
        %680 = vmatprep.subr.bf16.mxu0 0
        %681 = vmatpush2.bf16.xpose.msra.mxu0 0
        %682 = vmatprep.subr.bf16.mxu0 0
        %683 = vmatpush2.bf16.xpose.msra.mxu0 0
        %684 = vmatprep.subr.bf16.mxu0 0
        %685 = vmatpush2.bf16.xpose.msra.mxu0 0
        %686 = vmatprep.mubr.bf16.mxu0 0
        %687 = vmatmul.mubr.bf16.gmra.mxu0 %v649
        %v688 = vpop.f32.mrf.mxu0
        %v689 = vadd.f32 %v533, %v688
        %v690 = vpop.f32.mrf.mxu0
        %v691 = vpop.f32.mrf.mxu0
        %v692 = vpop.f32.mrf.mxu0
        %693 = vdwg.mxu0
        %v694 = vsel %vm534, %v689, -inf
        %695 = vmax.xlane.f32.xlu0 %v694
        %v696 = vpop.xlane.xlu0 %695
        %v697 = vsub.f32 %v689, %v696
        %v698 = vmul.f32 %v697, 1.442695
        %v699 = vpow.pop %v698
        %v700 = vsel %vm534, %v699, 0.0
        %701 = vadd.xlane.f32.xlu0 %v700
        %v702 = vpop.xlane.xlu0 %701
        %v703 = vrcp.pop %v702
        %v704 = vmul.f32 %v699, %v703
        %v705 = vpack.c.bf16 %v704, %v704
        %706 = vrot.lane.b32.xlu0 %v532, 88
        %v707 = vpop.permute.xlu0 %706
        %v709 = vsel %vm534, %v705, 0
        %v712 = vsel %vm599, %v707, 0
        %714 = vmatprep.subr.bf16.mxu0 0
        %715 = vmatpush1.bf16.msra.mxu0 0
        %716 = vmatprep.subr.bf16.mxu0 0
        %717 = vmatpush1.bf16.msra.mxu0 0
        %718 = vmatprep.subr.bf16.mxu0 0
        %719 = vmatpush1.bf16.msra.mxu0 0
        %720 = vmatprep.subr.bf16.mxu0 0
        %721 = vmatpush1.bf16.msra.mxu0 0
        %722 = vmatprep.subr.bf16.mxu0 0
        %723 = vmatpush1.bf16.msra.mxu0 0
        %724 = vmatprep.subr.bf16.mxu0 0
        %725 = vmatpush1.bf16.msra.mxu0 0
        %726 = vmatprep.subr.bf16.mxu0 0
        %727 = vmatpush1.bf16.msra.mxu0 0
        %728 = vmatprep.subr.bf16.mxu0 0
        %729 = vmatpush1.bf16.msra.mxu0 %v712
        %730 = vmatprep.subr.bf16.mxu0 0
        %731 = vmatpush2.bf16.msra.mxu0 0
        %732 = vmatprep.subr.bf16.mxu0 0
        %733 = vmatpush2.bf16.msra.mxu0 0
        %734 = vmatprep.subr.bf16.mxu0 0
        %735 = vmatpush2.bf16.msra.mxu0 0
        %736 = vmatprep.subr.bf16.mxu0 0
        %737 = vmatpush2.bf16.msra.mxu0 0
        %738 = vmatprep.subr.bf16.mxu0 0
        %739 = vmatpush2.bf16.msra.mxu0 0
        %740 = vmatprep.subr.bf16.mxu0 0
        %741 = vmatpush2.bf16.msra.mxu0 0
        %742 = vmatprep.subr.bf16.mxu0 0
        %743 = vmatpush2.bf16.msra.mxu0 0
        %744 = vmatprep.subr.bf16.mxu0 0
        %745 = vmatpush2.bf16.msra.mxu0 0
        %746 = vmatprep.mubr.bf16.mxu0 0
        %747 = vmatmul.mubr.bf16.gmra.mxu0 %v709
        %v748 = vpop.f32.mrf.mxu0
        %v749 = vadd.f32 0.0, %v748
        %v750 = vpop.f32.mrf.mxu0
        %v751 = vpop.f32.mrf.mxu0
        %v752 = vpop.f32.mrf.mxu0
        %753 = vdwg.mxu0
        %754 = vrot.lane.b32.xlu0 %v531, 112
        %v755 = vpop.permute.xlu0 %754
        %756 = vrot.lane.b32.xlu0 %v532, 112
        %v757 = vpop.permute.xlu0 %756
        %v759 = vsel %vm534, %v755, 0
        %v762 = vsel %vm534, %v757, 0
        %764 = vmatprep.subr.bf16.mxu0 0
        %765 = vmatpush1.bf16.xpose.msra.mxu0 0
        %766 = vmatprep.subr.bf16.mxu0 0
        %767 = vmatpush1.bf16.xpose.msra.mxu0 0
        %768 = vmatprep.subr.bf16.mxu0 0
        %769 = vmatpush1.bf16.xpose.msra.mxu0 0
        %770 = vmatprep.subr.bf16.mxu0 0
        %771 = vmatpush1.bf16.xpose.msra.mxu0 0
        %772 = vmatprep.subr.bf16.mxu0 0
        %773 = vmatpush1.bf16.xpose.msra.mxu0 0
        %774 = vmatprep.subr.bf16.mxu0 0
        %775 = vmatpush1.bf16.xpose.msra.mxu0 0
        %776 = vmatprep.subr.bf16.mxu0 0
        %777 = vmatpush1.bf16.xpose.msra.mxu0 0
        %778 = vmatprep.subr.bf16.mxu0 0
        %779 = vmatpush1.bf16.xpose.msra.mxu0 %v762
        %780 = vmatprep.subr.bf16.mxu0 0
        %781 = vmatpush2.bf16.xpose.msra.mxu0 0
        %782 = vmatprep.subr.bf16.mxu0 0
        %783 = vmatpush2.bf16.xpose.msra.mxu0 0
        %784 = vmatprep.subr.bf16.mxu0 0
        %785 = vmatpush2.bf16.xpose.msra.mxu0 0
        %786 = vmatprep.subr.bf16.mxu0 0
        %787 = vmatpush2.bf16.xpose.msra.mxu0 0
        %788 = vmatprep.subr.bf16.mxu0 0
        %789 = vmatpush2.bf16.xpose.msra.mxu0 0
        %790 = vmatprep.subr.bf16.mxu0 0
        %791 = vmatpush2.bf16.xpose.msra.mxu0 0
        %792 = vmatprep.subr.bf16.mxu0 0
        %793 = vmatpush2.bf16.xpose.msra.mxu0 0
        %794 = vmatprep.subr.bf16.mxu0 0
        %795 = vmatpush2.bf16.xpose.msra.mxu0 0
        %796 = vmatprep.mubr.bf16.mxu0 0
        %797 = vmatmul.mubr.bf16.gmra.mxu0 %v759
        %v798 = vpop.f32.mrf.mxu0
        %v799 = vadd.f32 %v533, %v798
        %v800 = vpop.f32.mrf.mxu0
        %v801 = vpop.f32.mrf.mxu0
        %v802 = vpop.f32.mrf.mxu0
        %803 = vdwg.mxu0
        %v804 = vsel %vm534, %v799, -inf
        %805 = vmax.xlane.f32.xlu0 %v804
        %v806 = vpop.xlane.xlu0 %805
        %v807 = vsub.f32 %v799, %v806
        %v808 = vmul.f32 %v807, 1.442695
        %v809 = vpow.pop %v808
        %v810 = vsel %vm534, %v809, 0.0
        %811 = vadd.xlane.f32.xlu0 %v810
        %v812 = vpop.xlane.xlu0 %811
        %v813 = vrcp.pop %v812
        %v814 = vmul.f32 %v809, %v813
        %v815 = vpack.c.bf16 %v814, %v814
        %816 = vrot.lane.b32.xlu0 %v532, 80
        %v817 = vpop.permute.xlu0 %816
        %v819 = vsel %vm534, %v815, 0
        %v822 = vsel %vm599, %v817, 0
        %824 = vmatprep.subr.bf16.mxu0 0
        %825 = vmatpush1.bf16.msra.mxu0 0
        %826 = vmatprep.subr.bf16.mxu0 0
        %827 = vmatpush1.bf16.msra.mxu0 0
        %828 = vmatprep.subr.bf16.mxu0 0
        %829 = vmatpush1.bf16.msra.mxu0 0
        %830 = vmatprep.subr.bf16.mxu0 0
        %831 = vmatpush1.bf16.msra.mxu0 0
        %832 = vmatprep.subr.bf16.mxu0 0
        %833 = vmatpush1.bf16.msra.mxu0 0
        %834 = vmatprep.subr.bf16.mxu0 0
        %835 = vmatpush1.bf16.msra.mxu0 0
        %836 = vmatprep.subr.bf16.mxu0 0
        %837 = vmatpush1.bf16.msra.mxu0 0
        %838 = vmatprep.subr.bf16.mxu0 0
        %839 = vmatpush1.bf16.msra.mxu0 %v822
        %840 = vmatprep.subr.bf16.mxu0 0
        %841 = vmatpush2.bf16.msra.mxu0 0
        %842 = vmatprep.subr.bf16.mxu0 0
        %843 = vmatpush2.bf16.msra.mxu0 0
        %844 = vmatprep.subr.bf16.mxu0 0
        %845 = vmatpush2.bf16.msra.mxu0 0
        %846 = vmatprep.subr.bf16.mxu0 0
        %847 = vmatpush2.bf16.msra.mxu0 0
        %848 = vmatprep.subr.bf16.mxu0 0
        %849 = vmatpush2.bf16.msra.mxu0 0
        %850 = vmatprep.subr.bf16.mxu0 0
        %851 = vmatpush2.bf16.msra.mxu0 0
        %852 = vmatprep.subr.bf16.mxu0 0
        %853 = vmatpush2.bf16.msra.mxu0 0
        %854 = vmatprep.subr.bf16.mxu0 0
        %855 = vmatpush2.bf16.msra.mxu0 0
        %856 = vmatprep.mubr.bf16.mxu0 0
        %857 = vmatmul.mubr.bf16.gmra.mxu0 %v819
        %v858 = vpop.f32.mrf.mxu0
        %v859 = vadd.f32 0.0, %v858
        %v860 = vpop.f32.mrf.mxu0
        %v861 = vpop.f32.mrf.mxu0
        %v862 = vpop.f32.mrf.mxu0
        %863 = vdwg.mxu0
        %864 = vrot.lane.b32.xlu0 %v531, 104
        %v865 = vpop.permute.xlu0 %864
        %866 = vrot.lane.b32.xlu0 %v532, 104
        %v867 = vpop.permute.xlu0 %866
        %v869 = vsel %vm534, %v865, 0
        %v872 = vsel %vm534, %v867, 0
        %874 = vmatprep.subr.bf16.mxu0 0
        %875 = vmatpush1.bf16.xpose.msra.mxu0 0
        %876 = vmatprep.subr.bf16.mxu0 0
        %877 = vmatpush1.bf16.xpose.msra.mxu0 0
        %878 = vmatprep.subr.bf16.mxu0 0
        %879 = vmatpush1.bf16.xpose.msra.mxu0 0
        %880 = vmatprep.subr.bf16.mxu0 0
        %881 = vmatpush1.bf16.xpose.msra.mxu0 0
        %882 = vmatprep.subr.bf16.mxu0 0
        %883 = vmatpush1.bf16.xpose.msra.mxu0 0
        %884 = vmatprep.subr.bf16.mxu0 0
        %885 = vmatpush1.bf16.xpose.msra.mxu0 0
        %886 = vmatprep.subr.bf16.mxu0 0
        %887 = vmatpush1.bf16.xpose.msra.mxu0 0
        %888 = vmatprep.subr.bf16.mxu0 0
        %889 = vmatpush1.bf16.xpose.msra.mxu0 %v872
        %890 = vmatprep.subr.bf16.mxu0 0
        %891 = vmatpush2.bf16.xpose.msra.mxu0 0
        %892 = vmatprep.subr.bf16.mxu0 0
        %893 = vmatpush2.bf16.xpose.msra.mxu0 0
        %894 = vmatprep.subr.bf16.mxu0 0
        %895 = vmatpush2.bf16.xpose.msra.mxu0 0
        %896 = vmatprep.subr.bf16.mxu0 0
        %897 = vmatpush2.bf16.xpose.msra.mxu0 0
        %898 = vmatprep.subr.bf16.mxu0 0
        %899 = vmatpush2.bf16.xpose.msra.mxu0 0
        %900 = vmatprep.subr.bf16.mxu0 0
        %901 = vmatpush2.bf16.xpose.msra.mxu0 0
        %902 = vmatprep.subr.bf16.mxu0 0
        %903 = vmatpush2.bf16.xpose.msra.mxu0 0
        %904 = vmatprep.subr.bf16.mxu0 0
        %905 = vmatpush2.bf16.xpose.msra.mxu0 0
        %906 = vmatprep.mubr.bf16.mxu0 0
        %907 = vmatmul.mubr.bf16.gmra.mxu0 %v869
        %v908 = vpop.f32.mrf.mxu0
        %v909 = vadd.f32 %v533, %v908
        %v910 = vpop.f32.mrf.mxu0
        %v911 = vpop.f32.mrf.mxu0
        %v912 = vpop.f32.mrf.mxu0
        %913 = vdwg.mxu0
        %v914 = vsel %vm534, %v909, -inf
        %915 = vmax.xlane.f32.xlu0 %v914
        %v916 = vpop.xlane.xlu0 %915
        %v917 = vsub.f32 %v909, %v916
        %v918 = vmul.f32 %v917, 1.442695
        %v919 = vpow.pop %v918
        %v920 = vsel %vm534, %v919, 0.0
        %921 = vadd.xlane.f32.xlu0 %v920
        %v922 = vpop.xlane.xlu0 %921
        %v923 = vrcp.pop %v922
        %v924 = vmul.f32 %v919, %v923
        %v925 = vpack.c.bf16 %v924, %v924
        %926 = vrot.lane.b32.xlu0 %v532, 72
        %v927 = vpop.permute.xlu0 %926
        %v929 = vsel %vm534, %v925, 0
        %v932 = vsel %vm599, %v927, 0
        %934 = vmatprep.subr.bf16.mxu0 0
        %935 = vmatpush1.bf16.msra.mxu0 0
        %936 = vmatprep.subr.bf16.mxu0 0
        %937 = vmatpush1.bf16.msra.mxu0 0
        %938 = vmatprep.subr.bf16.mxu0 0
        %939 = vmatpush1.bf16.msra.mxu0 0
        %940 = vmatprep.subr.bf16.mxu0 0
        %941 = vmatpush1.bf16.msra.mxu0 0
        %942 = vmatprep.subr.bf16.mxu0 0
        %943 = vmatpush1.bf16.msra.mxu0 0
        %944 = vmatprep.subr.bf16.mxu0 0
        %945 = vmatpush1.bf16.msra.mxu0 0
        %946 = vmatprep.subr.bf16.mxu0 0
        %947 = vmatpush1.bf16.msra.mxu0 0
        %948 = vmatprep.subr.bf16.mxu0 0
        %949 = vmatpush1.bf16.msra.mxu0 %v932
        %950 = vmatprep.subr.bf16.mxu0 0
        %951 = vmatpush2.bf16.msra.mxu0 0
        %952 = vmatprep.subr.bf16.mxu0 0
        %953 = vmatpush2.bf16.msra.mxu0 0
        %954 = vmatprep.subr.bf16.mxu0 0
        %955 = vmatpush2.bf16.msra.mxu0 0
        %956 = vmatprep.subr.bf16.mxu0 0
        %957 = vmatpush2.bf16.msra.mxu0 0
        %958 = vmatprep.subr.bf16.mxu0 0
        %959 = vmatpush2.bf16.msra.mxu0 0
        %960 = vmatprep.subr.bf16.mxu0 0
        %961 = vmatpush2.bf16.msra.mxu0 0
        %962 = vmatprep.subr.bf16.mxu0 0
        %963 = vmatpush2.bf16.msra.mxu0 0
        %964 = vmatprep.subr.bf16.mxu0 0
        %965 = vmatpush2.bf16.msra.mxu0 0
        %966 = vmatprep.mubr.bf16.mxu0 0
        %967 = vmatmul.mubr.bf16.gmra.mxu0 %v929
        %v968 = vpop.f32.mrf.mxu0
        %v969 = vadd.f32 0.0, %v968
        %v970 = vpop.f32.mrf.mxu0
        %v971 = vpop.f32.mrf.mxu0
        %v972 = vpop.f32.mrf.mxu0
        %973 = vdwg.mxu0
        %975 = vrot.lane.b32.xlu0 %v749, 8
        %v976 = vpop.permute.xlu0 %975
        %979 = vrot.lane.b32.xlu0 %v859, 16
        %v980 = vpop.permute.xlu0 %979
        %983 = vrot.lane.b32.xlu0 %v969, 24
        %v984 = vpop.permute.xlu0 %983
        %v986 = vsel %vm534, %v638, %v976
        %vm987 = vcmask 130048
        %v988 = vsel %vm987, %v986, %v980
        %vm989 = vcmask 195584
        %v990 = vsel %vm989, %v988, %v984
        %991 = vst.msk [vmem:[%s393] sm:$0xff] %vm420, %v990
        %s992 = sand.u32 %s198, 1
        %s993 = scalar_lea.sflag [#allocation4], %s992
        %s994 = sand.u32 %s198, 1
        %s995 = smul.addr %s994, 8
        %s996 = scalar_lea.vmem [#allocation11], %s995
        // Predicated region
        $region69: #{tpu_custom_call.1} parent=47 // pred_check
          %p997 = pneg %p208
        $region70: #{tpu_custom_call.1} parent=47 // pred_check_branch
          %999 = sbr.rel (%p997) target = $region72
        $region71: #{tpu_custom_call.1} parent=47 // pred_region
          %s1001 = ssub.s32 128, 128
          %1002 = vsyncadd %s993, %s1001
          %s1003 = smul.addr %s28, 128
          %s1004 = scalar_lea.hbm %s7, %s1003
          %s1006 = sshll.u32 %s996, 4
          %s1007 = int_to_ptr.vmem [resolvable:$true] %s1006
          %1009 = dma.vmem_to_hbm [thread:$0]  %s1007, 128, %s1004, %s993
        $region72: #{tpu_custom_call.1} parent=47 // pred_fallthru
          _
      $region48: #{tpu_custom_call.1} parent=5 // pred_fallthru
        _
      %p1010 = scmp.le.s32.totalorder 2, %s23
      // Predicated region
      $region73: #{tpu_custom_call.1} parent=5 // pred_check
        %p1011 = pneg %p1010
      $region74: #{tpu_custom_call.1} parent=5 // pred_check_branch
        %1013 = sbr.rel (%p1011) target = $region76
      $region75: #{tpu_custom_call.1} parent=5 // pred_region
        %s1014 = ssub.s32 %s23, 2
        // Predicated region
        $region77: #{tpu_custom_call.1} parent=75 // pred_check
          %p1015 = pneg %p214
        $region78: #{tpu_custom_call.1} parent=75 // pred_check_branch
          %1017 = sbr.rel (%p1015) target = $region80
        $region79: #{tpu_custom_call.1} parent=75 // pred_region
          %s1018 = sand.u32 %s199, 1
          %s1019 = scalar_lea.sflag [#allocation4], %s1018
          %s1020 = sand.u32 %s199, 1
          %s1021 = smul.addr %s1020, 8
          %s1022 = scalar_lea.vmem [#allocation11], %s1021
          %1023 = dma.done %s1019, 128
        $region80: #{tpu_custom_call.1} parent=75 // pred_fallthru
          _
      $region76: #{tpu_custom_call.1} parent=5 // pred_fallthru
        _
    $region6: #{tpu_custom_call.1} parent=1 // loop_footer
      %s27 = sadd.s32 1, %s23
    $region7: #{tpu_custom_call.1} parent=1 // loop_footer_branch
      %22 = sbr.rel target = $region3
    $region8: #{tpu_custom_call.1} parent=1 // loop_exit
      _
    %1024 = vsyncpa [#allocation3], 1
    %s1025 = scalar_lea.sflag [#allocation3], 1
    %1026 = vsyncpa %s1025, 1
    %1027 = vsyncpa [#allocation6], 1
    %s1028 = scalar_lea.sflag [#allocation6], 1
    %1029 = vsyncpa %s1028, 1
    %1030 = vsyncpa [#allocation9], 1
    %1031 = vsyncpa [#allocation4], 1
    %s1032 = scalar_lea.sflag [#allocation4], 1
    %1033 = vsyncpa %s1032, 1

</llo_original>
